<compile_context>
chip_gen: v5e
topology: v5e:2x2
jax: 0.10.0
libtpu: 0.0.40
codegen_flags: <defaults>
</compile_context>

<pallas_src>
import jax
import jax.numpy as jnp
from jax.experimental import pallas as pl
from jax.experimental.pallas import tpu as pltpu


def _round_up(n, m):
    return ((n + m - 1) // m) * m


def _pneumonia_mlp_kernel(x_ref, w1_ref, b1_ref, w2_ref, b2_ref, w3t_ref, b3_ref,
                          o_ref):
    # x tile: (tb, F) f32 straight from HBM; cast to bf16 in-kernel (VPU).
    x = x_ref[...].astype(jnp.bfloat16)

    # fc1: Linear(input_size, 64) + ReLU   (bf16 MXU matmul, f32 accumulate)
    h1 = jnp.dot(x, w1_ref[...], preferred_element_type=jnp.float32) + b1_ref[...]
    h1 = jnp.maximum(h1, 0.0)

    # fc2: Linear(64, 32) + ReLU
    h2 = jnp.dot(h1.astype(jnp.bfloat16), w2_ref[...],
                 preferred_element_type=jnp.float32) + b2_ref[...]
    h2 = jnp.maximum(h2, 0.0)

    # fc3: Linear(32, 1) + Sigmoid, computed transposed (NT dot_general) so the
    # result is lane-dense (1, tb) and the store is a single unmasked block.
    logits_t = jax.lax.dot_general(
        w3t_ref[...], h2.astype(jnp.bfloat16),
        dimension_numbers=(((1,), (1,)), ((), ())),
        preferred_element_type=jnp.float32)                      # (1, tb)
    o_ref[0] = jax.nn.sigmoid(logits_t + b3_ref[...])            # (1, tb) f32


def pneumonia_nn_forward(x, params, *, tb=8192):
    """x: (B, input_size) float32; params: dict of f32 weights/biases."""
    B, F = x.shape

    # Weights bf16 (tiny; doubles MXU rate). Biases f32 for the f32 tail.
    w1 = params["w1"].astype(jnp.bfloat16)            # (F, 64)
    w2 = params["w2"].astype(jnp.bfloat16)            # (64, 32)
    w3t = params["w3"].astype(jnp.bfloat16).reshape(1, -1)   # (1, 32)
    b1 = params["b1"].astype(jnp.float32)              # (1, 64)
    b2 = params["b2"].astype(jnp.float32)              # (1, 32)
    b3 = params["b3"].astype(jnp.float32).reshape(1, 1)  # (1, 1)

    # Batch tile: multiple of 8 (sublanes); cap at ~half the batch so a v7x
    # megacore sees >= 2 whole tiles (harmless no-op on 1-TC v5e/v6e).
    half = _round_up(pl.cdiv(B, 2), 8)
    tb = max(8, min(_round_up(int(tb), 8), half))
    n_tiles = pl.cdiv(B, tb)   # last block relies on implicit OOB padding

    # Constant index_map => block never changes => array stays VMEM-resident.
    resident = lambda a: pl.BlockSpec(a.shape, lambda i, _nd=a.ndim: (0,) * _nd)

    out = pl.pallas_call(
        _pneumonia_mlp_kernel,
        out_shape=jax.ShapeDtypeStruct((n_tiles, 1, tb), jnp.float32),
        grid=(n_tiles,),
        in_specs=[
            pl.BlockSpec((tb, F), lambda i: (i, 0)),   # x: pipelined over batch
            resident(w1), resident(b1),
            resident(w2), resident(b2),
            resident(w3t), resident(b3),
        ],
        out_specs=pl.BlockSpec((1, 1, tb), lambda i: (i, 0, 0)),  # lane-dense
        compiler_params=pltpu.CompilerParams(
            dimension_semantics=("parallel",),      # shard batch tiles across TCs
            vmem_limit_bytes=48 * 1024 * 1024,      # fits v7x 64MiB; roomy on v5e/v6e
        ),
    )(x, w1, b1, w2, b2, w3t, b3)

    # (n_tiles, 1, tb) -> (n_tiles*tb, 1) -> drop padded tail rows.
    return out.reshape(n_tiles * tb, 1)[:B]


def init_params(key, input_size):
    """Deterministic init mimicking nn.Linear default (uniform +- 1/sqrt(fan_in))."""
    ks = jax.random.split(key, 6)

    def linear(kw, kb, fan_in, fan_out):
        bound = 1.0 / jnp.sqrt(fan_in)
        w = jax.random.uniform(kw, (fan_in, fan_out), jnp.float32, -bound, bound)
        b = jax.random.uniform(kb, (1, fan_out), jnp.float32, -bound, bound)
        return w, b

    w1, b1 = linear(ks[0], ks[1], input_size, 64)
    w2, b2 = linear(ks[2], ks[3], 64, 32)
    w3, b3 = linear(ks[4], ks[5], 32, 1)
    return {"w1": w1, "b1": b1, "w2": w2, "b2": b2, "w3": w3, "b3": b3}


def _reference_forward(x, p):
    # Same dtype recipe as the kernel (bf16 matmuls, f32 accumulation/tail).
    xb = x.astype(jnp.bfloat16)
    h1 = jnp.maximum(
        jnp.dot(xb, p["w1"].astype(jnp.bfloat16),
                preferred_element_type=jnp.float32) + p["b1"], 0.0)
    h2 = jnp.maximum(
        jnp.dot(h1.astype(jnp.bfloat16), p["w2"].astype(jnp.bfloat16),
                preferred_element_type=jnp.float32) + p["b2"], 0.0)
    logits = jnp.dot(h2.astype(jnp.bfloat16), p["w3"].astype(jnp.bfloat16),
                     preferred_element_type=jnp.float32) + p["b3"]
    return jax.nn.sigmoid(logits)


if __name__ == "__main__":
    key = jax.random.PRNGKey(0)
    k_x, k_x2, k_p = jax.random.split(key, 3)

    input_size = 32
    params = init_params(k_p, input_size)

    # Small single-tile case.
    x = jax.random.normal(k_x, (8, input_size), jnp.float32)
    out = jax.block_until_ready(pneumonia_nn_forward(x, params))
    ref = _reference_forward(x, params)
    assert out.shape == (8, 1)
    assert jnp.allclose(out, ref, atol=2e-3, rtol=2e-3)

    # Multi-tile case: batch not a multiple of the tile exercises the implicit
    # last-block padding path and the multi-step batch pipeline.
    x2 = jax.random.normal(k_x2, (200, input_size), jnp.float32)
    out2 = jax.block_until_ready(pneumonia_nn_forward(x2, params, tb=64))
    ref2 = _reference_forward(x2, params)
    assert out2.shape == (200, 1)
    assert jnp.allclose(out2, ref2, atol=2e-3, rtol=2e-3)

    print("KERNEL_OK")
</pallas_src>

<mosaic_0001>
module attributes {stable_mosaic.version = 11 : i64} {
  func.func @_pneumonia_mlp_kernel(%arg0: i32, %arg1: memref<8x32xf32, #tpu.memory_space<vmem>>, %arg2: memref<32x64xbf16, #tpu.memory_space<vmem>>, %arg3: memref<1x64xf32, #tpu.memory_space<vmem>>, %arg4: memref<64x32xbf16, #tpu.memory_space<vmem>>, %arg5: memref<1x32xf32, #tpu.memory_space<vmem>>, %arg6: memref<1x32xbf16, #tpu.memory_space<vmem>>, %arg7: memref<1x1xf32, #tpu.memory_space<vmem>>, %arg8: memref<1x1x8xf32, #tpu.memory_space<vmem>>) attributes {dimension_semantics = [#tpu.dimension_semantics<parallel>], iteration_bounds = array<i64: 1>, scalar_prefetch = 0 : i64, scratch_operands = 0 : i64, tpu.core_type = #tpu.core_type<tc>, window_params = [{transform_indices = @transform_0, window_bounds = array<i64: 8, 32>}, {pipeline_mode = #tpu.pipeline_mode<synchronous>, transform_indices = @transform_1, window_bounds = array<i64: 32, 64>}, {pipeline_mode = #tpu.pipeline_mode<synchronous>, transform_indices = @transform_2, window_bounds = array<i64: 1, 64>}, {pipeline_mode = #tpu.pipeline_mode<synchronous>, transform_indices = @transform_3, window_bounds = array<i64: 64, 32>}, {pipeline_mode = #tpu.pipeline_mode<synchronous>, transform_indices = @transform_4, window_bounds = array<i64: 1, 32>}, {pipeline_mode = #tpu.pipeline_mode<synchronous>, transform_indices = @transform_5, window_bounds = array<i64: 1, 32>}, {pipeline_mode = #tpu.pipeline_mode<synchronous>, transform_indices = @transform_6, window_bounds = array<i64: 1, 1>}, {transform_indices = @transform_7, window_bounds = array<i64: 1, 1, 8>}]} {
    %c0 = arith.constant 0 : index
    %c0_0 = arith.constant 0 : index
    %0 = vector.load %arg1[%c0, %c0_0] : memref<8x32xf32, #tpu.memory_space<vmem>>, vector<8x32xf32>
    %1 = arith.truncf %0 : vector<8x32xf32> to vector<8x32xbf16>
    %c0_1 = arith.constant 0 : index
    %c0_2 = arith.constant 0 : index
    %2 = vector.load %arg2[%c0_1, %c0_2] : memref<32x64xbf16, #tpu.memory_space<vmem>>, vector<32x64xbf16>
    %cst = arith.constant dense<0.000000e+00> : vector<8x64xf32>
    %3 = tpu.matmul %1, %2, %cst {dimension_numbers = #tpu.dot_dimension_numbers<[1], [0], [0], [1], [0, 0, 1, 1], [], []>} : vector<8x32xbf16>, vector<32x64xbf16>, vector<8x64xf32> -> vector<8x64xf32>
    %c0_3 = arith.constant 0 : index
    %c0_4 = arith.constant 0 : index
    %4 = vector.load %arg3[%c0_3, %c0_4] : memref<1x64xf32, #tpu.memory_space<vmem>>, vector<1x64xf32>
    %5 = vector.broadcast %4 : vector<1x64xf32> to vector<8x64xf32>
    %6 = arith.addf %3, %5 : vector<8x64xf32>
    %cst_5 = arith.constant 0.000000e+00 : f32
    %7 = vector.broadcast %cst_5 : f32 to vector<8x64xf32>
    %8 = arith.maximumf %6, %7 : vector<8x64xf32>
    %9 = arith.truncf %8 : vector<8x64xf32> to vector<8x64xbf16>
    %c0_6 = arith.constant 0 : index
    %c0_7 = arith.constant 0 : index
    %10 = vector.load %arg4[%c0_6, %c0_7] : memref<64x32xbf16, #tpu.memory_space<vmem>>, vector<64x32xbf16>
    %cst_8 = arith.constant dense<0.000000e+00> : vector<8x32xf32>
    %11 = tpu.matmul %9, %10, %cst_8 {dimension_numbers = #tpu.dot_dimension_numbers<[1], [0], [0], [1], [0, 0, 1, 1], [], []>} : vector<8x64xbf16>, vector<64x32xbf16>, vector<8x32xf32> -> vector<8x32xf32>
    %c0_9 = arith.constant 0 : index
    %c0_10 = arith.constant 0 : index
    %12 = vector.load %arg5[%c0_9, %c0_10] : memref<1x32xf32, #tpu.memory_space<vmem>>, vector<1x32xf32>
    %13 = vector.broadcast %12 : vector<1x32xf32> to vector<8x32xf32>
    %14 = arith.addf %11, %13 : vector<8x32xf32>
    %cst_11 = arith.constant 0.000000e+00 : f32
    %15 = vector.broadcast %cst_11 : f32 to vector<8x32xf32>
    %16 = arith.maximumf %14, %15 : vector<8x32xf32>
    %c0_12 = arith.constant 0 : index
    %c0_13 = arith.constant 0 : index
    %17 = vector.load %arg6[%c0_12, %c0_13] : memref<1x32xbf16, #tpu.memory_space<vmem>>, vector<1x32xbf16>
    %18 = arith.truncf %16 : vector<8x32xf32> to vector<8x32xbf16>
    %cst_14 = arith.constant dense<0.000000e+00> : vector<1x8xf32>
    %19 = tpu.matmul %17, %18, %cst_14 {dimension_numbers = #tpu.dot_dimension_numbers<[1], [1], [0], [0], [0, 0, 1, 0], [], []>} : vector<1x32xbf16>, vector<8x32xbf16>, vector<1x8xf32> -> vector<1x8xf32>
    %c0_15 = arith.constant 0 : index
    %c0_16 = arith.constant 0 : index
    %20 = vector.load %arg7[%c0_15, %c0_16] : memref<1x1xf32, #tpu.memory_space<vmem>>, vector<1x1xf32>
    %21 = vector.broadcast %20 : vector<1x1xf32> to vector<1x8xf32>
    %22 = arith.addf %19, %21 : vector<1x8xf32>
    %23 = arith.negf %22 : vector<1x8xf32>
    %24 = math.exp %23 : vector<1x8xf32>
    %cst_17 = arith.constant 1.000000e+00 : f32
    %25 = vector.broadcast %cst_17 : f32 to vector<1x8xf32>
    %26 = arith.addf %25, %24 : vector<1x8xf32>
    %27 = arith.divf %25, %26 : vector<1x8xf32>
    %c0_18 = arith.constant 0 : index
    %c0_19 = arith.constant 0 : index
    %c0_20 = arith.constant 0 : index
    %28 = vector.load %arg8[%c0_18, %c0_19, %c0_20] : memref<1x1x8xf32, #tpu.memory_space<vmem>>, vector<1x1x8xf32>
    %29 = vector.shape_cast %28 : vector<1x1x8xf32> to vector<1x8xf32>
    %30 = vector.shape_cast %27 : vector<1x8xf32> to vector<1x1x8xf32>
    tpu.vector_store %arg8[%c0_18, %c0_19, %c0_20], %30 {strides = array<i32>} : memref<1x1x8xf32, #tpu.memory_space<vmem>>, vector<1x1x8xf32>,
    return
  }
  func.func @transform_0(%arg0: i32) -> (i32, i32) {
    %c0_i32 = arith.constant 0 : i32
    %c0_i32_0 = arith.constant 0 : i32
    return %arg0, %c0_i32 : i32, i32
  }
  func.func @transform_1(%arg0: i32) -> (i32, i32) {
    %c0_i32 = arith.constant 0 : i32
    %c0_i32_0 = arith.constant 0 : i32
    %c0_i32_1 = arith.constant 0 : i32
    return %c0_i32, %c0_i32_0 : i32, i32
  }
  func.func @transform_2(%arg0: i32) -> (i32, i32) {
    %c0_i32 = arith.constant 0 : i32
    %c0_i32_0 = arith.constant 0 : i32
    %c0_i32_1 = arith.constant 0 : i32
    return %c0_i32, %c0_i32_0 : i32, i32
  }
  func.func @transform_3(%arg0: i32) -> (i32, i32) {
    %c0_i32 = arith.constant 0 : i32
    %c0_i32_0 = arith.constant 0 : i32
    %c0_i32_1 = arith.constant 0 : i32
    return %c0_i32, %c0_i32_0 : i32, i32
  }
  func.func @transform_4(%arg0: i32) -> (i32, i32) {
    %c0_i32 = arith.constant 0 : i32
    %c0_i32_0 = arith.constant 0 : i32
    %c0_i32_1 = arith.constant 0 : i32
    return %c0_i32, %c0_i32_0 : i32, i32
  }
  func.func @transform_5(%arg0: i32) -> (i32, i32) {
    %c0_i32 = arith.constant 0 : i32
    %c0_i32_0 = arith.constant 0 : i32
    %c0_i32_1 = arith.constant 0 : i32
    return %c0_i32, %c0_i32_0 : i32, i32
  }
  func.func @transform_6(%arg0: i32) -> (i32, i32) {
    %c0_i32 = arith.constant 0 : i32
    %c0_i32_0 = arith.constant 0 : i32
    %c0_i32_1 = arith.constant 0 : i32
    return %c0_i32, %c0_i32_0 : i32, i32
  }
  func.func @transform_7(%arg0: i32) -> (i32, i32, i32) {
    %c0_i32 = arith.constant 0 : i32
    %c0_i32_0 = arith.constant 0 : i32
    %c0_i32_1 = arith.constant 0 : i32
    return %arg0, %c0_i32, %c0_i32_0 : i32, i32, i32
  }
}

</mosaic_0001>

<llo_original>
// kernel: tpu_custom_call.1
$region0: #{tpu_custom_call.1}
  #allocation0 [shape = 'u32[]', space=smem, size = 0x4, offset = 0x4, fixed_abs, tag = 'smem constant byte address 0x4 - core index']
  #allocation1 [shape = 'u32[72,128]{1,0:T(1,128)}', space=vmem, size = 0x9000, scoped, tag = 'internal scratch']
  #allocation2 [shape = 'f32[1,1]{1,0:T(1,128)S(1)}', space=vmem, size = 0x200, scoped, tag = 'scoped memory for tpu_custom_call.1']
  %s0 = inlined_call_operand.vmem [shape: f32[8,32], index: 0, kind: input, shape index: {}]
  %s1 = inlined_call_operand.vmem [shape: bf16[32,64], index: 1, kind: input, shape index: {}]
  %s2 = inlined_call_operand.vmem [shape: f32[1,64], index: 2, kind: input, shape index: {}]
  %s3 = inlined_call_operand.vmem [shape: bf16[64,32], index: 3, kind: input, shape index: {}]
  %s4 = inlined_call_operand.vmem [shape: f32[1,32], index: 4, kind: input, shape index: {}]
  %s5 = inlined_call_operand.vmem [shape: bf16[1,32], index: 5, kind: input, shape index: {}]
  %s6 = inlined_call_operand.<no memory space> [shape: f32[1,1], index: 6, kind: input, shape index: {}]
  %s7 = inlined_call_operand.hbm [shape: f32[1,1,8], index: 7, kind: output, shape index: {}]
  %s8 = sld [smem:[#allocation0]]
  $region38: #{tpu_custom_call.1} parent=0
    _
  %s10 = ssub.s32 1, %s8
  %s11 = scalar_select 0, %s10, %s8
  %v12 = vstv %s6
  %13 = vst [vmem:[#allocation2] sm:$0x1] %v12
  $region1: #{tpu_custom_call.1} parent=0
    #allocation3 [shape = 'u8[512]{0}', space=vmem, size = 0x400, scoped, tag = 'output window, operand 0, single buffered']
    #allocation4 [shape = 's32[1]{0}', space=sflag, size = 0x4, scoped, tag = 'scoped memory for tpu_custom_call.1']
    %14 = vsyncpa [#allocation4], 0
    // Predicated region
    $region2: #{tpu_custom_call.1} parent=1 // pred_check
      _
    $region3: #{tpu_custom_call.1} parent=1 // pred_check_branch
      %16 = sbr.rel (0) target = $region5
    $region4: #{tpu_custom_call.1} parent=1 // pred_region
      _
    $region5: #{tpu_custom_call.1} parent=1 // pred_fallthru
      _
    // Predicated region
    $region6: #{tpu_custom_call.1} parent=1 // pred_check
      _
    $region7: #{tpu_custom_call.1} parent=1 // pred_check_branch
      %18 = sbr.rel (0) target = $region9
    $region8: #{tpu_custom_call.1} parent=1 // pred_region
      _
    $region9: #{tpu_custom_call.1} parent=1 // pred_fallthru
      _
    // Predicated region
    $region10: #{tpu_custom_call.1} parent=1 // pred_check
      _
    $region11: #{tpu_custom_call.1} parent=1 // pred_check_branch
      %20 = sbr.rel (0) target = $region13
    $region12: #{tpu_custom_call.1} parent=1 // pred_region
      _
    $region13: #{tpu_custom_call.1} parent=1 // pred_fallthru
      _
    // Predicated region
    $region14: #{tpu_custom_call.1} parent=1 // pred_check
      _
    $region15: #{tpu_custom_call.1} parent=1 // pred_check_branch
      %22 = sbr.rel (0) target = $region17
    $region16: #{tpu_custom_call.1} parent=1 // pred_region
      _
    $region17: #{tpu_custom_call.1} parent=1 // pred_fallthru
      _
    // Predicated region
    $region18: #{tpu_custom_call.1} parent=1 // pred_check
      _
    $region19: #{tpu_custom_call.1} parent=1 // pred_check_branch
      %24 = sbr.rel (0) target = $region21
    $region20: #{tpu_custom_call.1} parent=1 // pred_region
      _
    $region21: #{tpu_custom_call.1} parent=1 // pred_fallthru
      _
    // Predicated region
    $region22: #{tpu_custom_call.1} parent=1 // pred_check
      _
    $region23: #{tpu_custom_call.1} parent=1 // pred_check_branch
      %26 = sbr.rel (0) target = $region25
    $region24: #{tpu_custom_call.1} parent=1 // pred_region
      _
    $region25: #{tpu_custom_call.1} parent=1 // pred_fallthru
      _
    // Predicated region
    $region26: #{tpu_custom_call.1} parent=1 // pred_check
      _
    $region27: #{tpu_custom_call.1} parent=1 // pred_check_branch
      %28 = sbr.rel (0) target = $region29
    $region28: #{tpu_custom_call.1} parent=1 // pred_region
      _
    $region29: #{tpu_custom_call.1} parent=1 // pred_fallthru
      _
    %v30 = vld [vmem:[%s0] sm:$0xff]
    %v31 = vpack.c.bf16 %v30, %v30
    %v32 = vld [vmem:[%s1] sm:$0xf]
    %v33 = vld [vmem:[%s1 + $0x4] sm:$0xf]
    %v34 = vld [vmem:[%s1 + $0x8] sm:$0xf]
    %v35 = vld [vmem:[%s1 + $0xc] sm:$0xf]
    %v36 = vld [vmem:[%s2] sm:$0x1]
    %v38 = vperm.slane %v36, 0
    %v44 = vunpack.c.l.b16 %v32
    %v45 = vunpack.c.l.b16 %v33
    %v46 = vunpack.c.l.b16 %v34
    %v47 = vunpack.c.l.b16 %v35
    %v48 = vpack.c.b16 %v45, %v44
    %v49 = vpack.c.b16 %v47, %v46
    %vm52 = vcmask 261120
    %v54 = vsel %vm52, %v31, 0
    %56 = vmatpush.bf16.msra.mxu0 0
    %57 = vmatpush.bf16.msra.mxu0 0
    %58 = vmatpush.bf16.msra.mxu0 0
    %59 = vmatpush.bf16.msra.mxu0 0
    %60 = vmatpush.bf16.msra.mxu0 0
    %61 = vmatpush.bf16.msra.mxu0 0
    %62 = vmatpush.bf16.msra.mxu0 %v49
    %63 = vmatpush.bf16.msra.mxu0 %v48
    %64 = vmatmul.bf16.gmra.mxu0 %v54
    %v65 = vpop.f32.mrf.mxu0
    %v66 = vadd.f32 %v38, %v65
    %v67 = vpop.f32.mrf.mxu0
    %68 = vdwg.mxu0
    %v69 = vmax.f32 %v66, 0.0
    %v70 = vpack.c.bf16 %v69, %v69
    %v71 = vld [vmem:[%s3] sm:$0xf]
    %v72 = vld [vmem:[%s3 + $0x4] sm:$0xf]
    %v73 = vld [vmem:[%s3 + $0x8] sm:$0xf]
    %v74 = vld [vmem:[%s3 + $0xc] sm:$0xf]
    %v75 = vld [vmem:[%s3 + $0x10] sm:$0xf]
    %v76 = vld [vmem:[%s3 + $0x14] sm:$0xf]
    %v77 = vld [vmem:[%s3 + $0x18] sm:$0xf]
    %v78 = vld [vmem:[%s3 + $0x1c] sm:$0xf]
    %v79 = vld [vmem:[%s4] sm:$0x1]
    %v81 = vperm.slane %v79, 0
    %v91 = vunpack.c.l.b16 %v71
    %v92 = vunpack.c.l.b16 %v72
    %v93 = vunpack.c.l.b16 %v73
    %v94 = vunpack.c.l.b16 %v74
    %v95 = vunpack.c.l.b16 %v75
    %v96 = vunpack.c.l.b16 %v76
    %v97 = vunpack.c.l.b16 %v77
    %v98 = vunpack.c.l.b16 %v78
    %v99 = vpack.c.b16 %v92, %v91
    %v100 = vpack.c.b16 %v94, %v93
    %v101 = vpack.c.b16 %v96, %v95
    %v102 = vpack.c.b16 %v98, %v97
    %vm107 = vcmask 523264
    %v109 = vsel %vm107, %v70, 0
    %111 = vmatpush.bf16.msra.mxu0 0
    %112 = vmatpush.bf16.msra.mxu0 0
    %113 = vmatpush.bf16.msra.mxu0 0
    %114 = vmatpush.bf16.msra.mxu0 0
    %115 = vmatpush.bf16.msra.mxu0 %v102
    %116 = vmatpush.bf16.msra.mxu0 %v101
    %117 = vmatpush.bf16.msra.mxu0 %v100
    %118 = vmatpush.bf16.msra.mxu0 %v99
    %119 = vmatmul.bf16.gmra.mxu0 %v109
    %v120 = vpop.f32.mrf.mxu0
    %v121 = vadd.f32 %v81, %v120
    %v122 = vpop.f32.mrf.mxu0
    %123 = vdwg.mxu0
    %v124 = vmax.f32 %v121, 0.0
    %v125 = vld [vmem:[%s5] sm:$0x1]
    %v126 = vpack.c.bf16 %v124, %v124
    %v127 = vld [vmem:[#allocation2] sm:$0x1]
    %129 = vset.pattern.permute.xlu0 0
    %130 = vperm.xlu0 %129, %v127
    %v131 = vpop.permute.xlu0 %130
    %v133 = vperm.slane %v131, 0
    %v135 = vsel %vm52, %v125, 0
    %v138 = vsel %vm52, %v126, 0
    %140 = vmatpush.bf16.xpose.msra.mxu0 0
    %141 = vmatpush.bf16.xpose.msra.mxu0 0
    %142 = vmatpush.bf16.xpose.msra.mxu0 0
    %143 = vmatpush.bf16.xpose.msra.mxu0 0
    %144 = vmatpush.bf16.xpose.msra.mxu0 0
    %145 = vmatpush.bf16.xpose.msra.mxu0 0
    %146 = vmatpush.bf16.xpose.msra.mxu0 0
    %147 = vmatpush.bf16.xpose.msra.mxu0 %v138
    %148 = vmatmul.bf16.gmra.mxu0 %v135
    %v149 = vpop.f32.mrf.mxu0
    %v150 = vadd.f32 %v133, %v149
    %v151 = vpop.f32.mrf.mxu0
    %152 = vdwg.mxu0
    %v153 = vxor.u32 %v150, 2147483648
    %v154 = vmul.f32 %v153, 1.442695
    %v155 = vpow.pop %v154
    %v156 = vadd.f32 %v155, 1.0
    %v157 = vrcp.pop %v156
    %v158 = vmul.f32 %v156, %v157
    %v159 = vsub.f32 1.0, %v158
    %v160 = vmul.f32 %v157, %v159
    %v161 = vadd.f32 %v157, %v160
    %vm162 = vweird.f32 %v156
    %vm163 = vweird.f32 %v157
    %vm164 = vmor %vm162, %vm163
    %v165 = vsel %vm164, %v157, %v161
    %v166 = vand.u32 2147483647, %v156
    %vm167 = vcmp.eq.f32.partialorder %v166, 8.507059e+37
    %v168 = vand.u32 %v156, 2147483648
    %v169 = vor.u32 1.1754944e-38, %v168
    %v170 = vsel %vm167, %v169, %v165
    %v171 = vmul.f32 1.0, %v170
    %vm172 = vcmask 57344
    %173 = vst.msk [vmem:[#allocation3] sm:$0x1] %vm172, %v171
    // Predicated region
    $region30: #{tpu_custom_call.1} parent=1 // pred_check
      _
    $region31: #{tpu_custom_call.1} parent=1 // pred_check_branch
      %175 = sbr.rel (0) target = $region33
    $region32: #{tpu_custom_call.1} parent=1 // pred_region
      %177 = vsyncadd [#allocation4], 0
      %s179 = sshll.u32 [#allocation3], 4
      %s180 = int_to_ptr.vmem [resolvable:$true] %s179
      %s181 = sshll.u32 %s7, 4
      %s182 = int_to_ptr.hbm [resolvable:$true] %s181
      %184 = dma.vmem_to_hbm [thread:$0]  %s180, 16, %s182, [#allocation4]
    $region33: #{tpu_custom_call.1} parent=1 // pred_fallthru
      _
    // Predicated region
    $region34: #{tpu_custom_call.1} parent=1 // pred_check
      _
    $region35: #{tpu_custom_call.1} parent=1 // pred_check_branch
      %186 = sbr.rel (0) target = $region37
    $region36: #{tpu_custom_call.1} parent=1 // pred_region
      %188 = dma.done [#allocation4], 16
    $region37: #{tpu_custom_call.1} parent=1 // pred_fallthru
      _
    %189 = vsyncpa [#allocation4], 1

</llo_original>
